<compile_context>
chip_gen: v7x
topology: tpu7x:2x2x1
jax: 0.10.0
libtpu: 0.0.40
codegen_flags: <defaults>
</compile_context>

<pallas_src>
import jax
import jax.numpy as jnp
from jax.experimental import pallas as pl
from jax.experimental.pallas import tpu as pltpu


def _round_up(n, m):
    return ((n + m - 1) // m) * m


# --------------------------------------------------------------------------
# Kernel: one batch-row tile per grid step.
#   x:  (TB, S) bf16    w1: (S, H) bf16   b1: (1, H) f32
#                       w2: (H, H) bf16   b2: (1, H) f32
#   fused head: wh (H, A2) bf16, bh (1, A2) f32, clamp lo/hi (1, A2) f32
#   out: (TB, A2) f32   (mean cols | clamped log_std cols | zero pad)
# --------------------------------------------------------------------------
def policy_kernel(x_ref, w1_ref, b1_ref, w2_ref, b2_ref,
                  wh_ref, bh_ref, lo_ref, hi_ref, out_ref):
    x = x_ref[...]
    h = jnp.dot(x, w1_ref[...], preferred_element_type=jnp.float32) + b1_ref[...]
    h = jnp.maximum(h, 0.0).astype(jnp.bfloat16)
    h = jnp.dot(h, w2_ref[...], preferred_element_type=jnp.float32) + b2_ref[...]
    h = jnp.maximum(h, 0.0).astype(jnp.bfloat16)
    o = jnp.dot(h, wh_ref[...], preferred_element_type=jnp.float32) + bh_ref[...]
    # per-column clamp: only the log_std columns have finite bounds (-20, 2)
    out_ref[...] = jnp.minimum(jnp.maximum(o, lo_ref[...]), hi_ref[...])


# --------------------------------------------------------------------------
# Parameter handling
# --------------------------------------------------------------------------
def init_params(key, state_dim, hidden_dim, action_dim):
    """PyTorch-Linear-style init; weights stored transposed as (in, out), f32."""
    ks = jax.random.split(key, 8)

    def lin(kw, kb, fan_in, fan_out):
        bound = 1.0 / jnp.sqrt(jnp.float32(fan_in))
        w = jax.random.uniform(kw, (fan_in, fan_out), jnp.float32, -bound, bound)
        b = jax.random.uniform(kb, (fan_out,), jnp.float32, -bound, bound)
        return w, b

    w1, b1 = lin(ks[0], ks[1], state_dim, hidden_dim)
    w2, b2 = lin(ks[2], ks[3], hidden_dim, hidden_dim)
    wm, bm = lin(ks[4], ks[5], hidden_dim, action_dim)
    ws, bs = lin(ks[6], ks[7], hidden_dim, action_dim)
    return dict(w1=w1, b1=b1, w2=w2, b2=b2, wm=wm, bm=bm, ws=ws, bs=bs)


def prepare_params(raw, state_dim, hidden_dim, action_dim):
    """Pad feature dims to 128 multiples, fuse heads, build clamp vectors."""
    S = _round_up(state_dim, 128)
    H = _round_up(hidden_dim, 128)
    A2 = _round_up(2 * action_dim, 128)

    def pad(a, shape):
        out = jnp.zeros(shape, a.dtype)
        return out.at[tuple(slice(0, s) for s in a.shape)].set(a)

    w1 = pad(raw["w1"], (S, H)).astype(jnp.bfloat16)
    b1 = pad(raw["b1"].reshape(1, -1), (1, H)).astype(jnp.float32)
    w2 = pad(raw["w2"], (H, H)).astype(jnp.bfloat16)
    b2 = pad(raw["b2"].reshape(1, -1), (1, H)).astype(jnp.float32)
    wh = pad(jnp.concatenate([raw["wm"], raw["ws"]], axis=1), (H, A2)).astype(jnp.bfloat16)
    bh = pad(jnp.concatenate([raw["bm"], raw["bs"]], axis=0).reshape(1, -1),
             (1, A2)).astype(jnp.float32)

    # clamp bounds: mean / padded columns unbounded, log_std columns in [-20, 2]
    lo = jnp.full((1, A2), -jnp.inf, jnp.float32)
    hi = jnp.full((1, A2), jnp.inf, jnp.float32)
    lo = lo.at[:, action_dim:2 * action_dim].set(-20.0)
    hi = hi.at[:, action_dim:2 * action_dim].set(2.0)

    return dict(w1=w1, b1=b1, w2=w2, b2=b2, wh=wh, bh=bh, lo=lo, hi=hi,
                dims=(state_dim, hidden_dim, action_dim, S, H, A2))


# --------------------------------------------------------------------------
# Forward wrapper
# --------------------------------------------------------------------------
def policy_net_forward(x, prepped, *, block_rows=256):
    state_dim, hidden_dim, action_dim, S, H, A2 = prepped["dims"]
    B = x.shape[0]

    # batch tile: multiple of 8 sublanes, capped at block_rows
    tb = min(_round_up(B, 8), block_rows)
    Bp = _round_up(B, tb)
    num_tiles = Bp // tb

    # zero-pad batch rows and state columns; cast to bf16 for the MXU
    xp = jnp.zeros((Bp, S), jnp.bfloat16)
    xp = xp.at[:B, :state_dim].set(x.astype(jnp.bfloat16))

    def const_spec(shape):
        return pl.BlockSpec(shape, lambda i: (0,) * len(shape))

    out = pl.pallas_call(
        policy_kernel,
        out_shape=jax.ShapeDtypeStruct((Bp, A2), jnp.float32),
        grid=(num_tiles,),
        in_specs=[
            pl.BlockSpec((tb, S), lambda i: (i, 0)),    # x: tiled over batch
            const_spec((S, H)), const_spec((1, H)),     # fc1 (VMEM-resident)
            const_spec((H, H)), const_spec((1, H)),     # fc2
            const_spec((H, A2)), const_spec((1, A2)),   # fused heads
            const_spec((1, A2)), const_spec((1, A2)),   # clamp lo / hi
        ],
        out_specs=pl.BlockSpec((tb, A2), lambda i: (i, 0)),
        compiler_params=pltpu.CompilerParams(
            dimension_semantics=("parallel",)),
    )(xp, prepped["w1"], prepped["b1"], prepped["w2"], prepped["b2"],
      prepped["wh"], prepped["bh"], prepped["lo"], prepped["hi"])

    mean = out[:B, :action_dim]
    log_std = out[:B, action_dim:2 * action_dim]
    return mean, log_std


# --------------------------------------------------------------------------
# References
# --------------------------------------------------------------------------
def reference_forward_bf16(x, prepped):
    """Same bf16-input / f32-accumulate math as the kernel (tight check)."""
    state_dim, hidden_dim, action_dim, S, H, A2 = prepped["dims"]
    xb = jnp.zeros((x.shape[0], S), jnp.bfloat16)
    xb = xb.at[:, :state_dim].set(x.astype(jnp.bfloat16))
    h = jnp.maximum(jnp.dot(xb, prepped["w1"],
                            preferred_element_type=jnp.float32) + prepped["b1"], 0.0)
    h = h.astype(jnp.bfloat16)
    h = jnp.maximum(jnp.dot(h, prepped["w2"],
                            preferred_element_type=jnp.float32) + prepped["b2"], 0.0)
    h = h.astype(jnp.bfloat16)
    o = jnp.dot(h, prepped["wh"], preferred_element_type=jnp.float32) + prepped["bh"]
    mean = o[:, :action_dim]
    log_std = jnp.clip(o[:, action_dim:2 * action_dim], -20.0, 2.0)
    return mean, log_std


def reference_forward_f32(x, raw):
    """Full-precision reference matching the PyTorch module semantics."""
    h = jnp.maximum(x @ raw["w1"] + raw["b1"], 0.0)
    h = jnp.maximum(h @ raw["w2"] + raw["b2"], 0.0)
    mean = h @ raw["wm"] + raw["bm"]
    log_std = jnp.clip(h @ raw["ws"] + raw["bs"], -20.0, 2.0)
    return mean, log_std


# --------------------------------------------------------------------------
if __name__ == "__main__":
    # Small shapes consistent with the module: per-agent obs -> hidden=64 -> 4 joints.
    state_dim, hidden_dim, action_dim = 32, 64, 4

    key = jax.random.PRNGKey(0)
    kx, kp, kx2 = jax.random.split(key, 3)
    raw = init_params(kp, state_dim, hidden_dim, action_dim)
    prepped = prepare_params(raw, state_dim, hidden_dim, action_dim)

    def check(batch, kxi):
        x = jax.random.normal(kxi, (batch, state_dim), dtype=jnp.float32)
        mean, log_std = policy_net_forward(x, prepped)
        jax.block_until_ready((mean, log_std))

        ref_m, ref_ls = reference_forward_bf16(x, prepped)
        assert jnp.allclose(mean, ref_m, atol=1e-3, rtol=1e-3)
        assert jnp.allclose(log_std, ref_ls, atol=1e-3, rtol=1e-3)

        f32_m, f32_ls = reference_forward_f32(x, raw)
        assert jnp.allclose(mean, f32_m, atol=5e-2, rtol=5e-2)
        assert jnp.allclose(log_std, f32_ls, atol=5e-2, rtol=5e-2)

        assert mean.shape == (batch, action_dim)
        assert log_std.shape == (batch, action_dim)
        assert float(jnp.max(log_std)) <= 2.0 and float(jnp.min(log_std)) >= -20.0

    check(8, kx)      # tiny, single-tile path
    check(512, kx2)   # multi-tile "parallel" batch grid path (2 tiles of 256)

    print("KERNEL_OK")
</pallas_src>

<mosaic_0001>
module attributes {stable_mosaic.version = 11 : i64} {
  func.func @policy_kernel(%arg0: i32, %arg1: memref<8x128xbf16, #tpu.memory_space<vmem>>, %arg2: memref<128x128xbf16, #tpu.memory_space<vmem>>, %arg3: memref<1x128xf32, #tpu.memory_space<vmem>>, %arg4: memref<128x128xbf16, #tpu.memory_space<vmem>>, %arg5: memref<1x128xf32, #tpu.memory_space<vmem>>, %arg6: memref<128x128xbf16, #tpu.memory_space<vmem>>, %arg7: memref<1x128xf32, #tpu.memory_space<vmem>>, %arg8: memref<1x128xf32, #tpu.memory_space<vmem>>, %arg9: memref<1x128xf32, #tpu.memory_space<vmem>>, %arg10: memref<8x128xf32, #tpu.memory_space<vmem>>) attributes {dimension_semantics = [#tpu.dimension_semantics<parallel>], iteration_bounds = array<i64: 1>, scalar_prefetch = 0 : i64, scratch_operands = 0 : i64, tpu.core_type = #tpu.core_type<tc>, window_params = [{transform_indices = @transform_0, window_bounds = array<i64: 8, 128>}, {pipeline_mode = #tpu.pipeline_mode<synchronous>, transform_indices = @transform_1, window_bounds = array<i64: 128, 128>}, {pipeline_mode = #tpu.pipeline_mode<synchronous>, transform_indices = @transform_2, window_bounds = array<i64: 1, 128>}, {pipeline_mode = #tpu.pipeline_mode<synchronous>, transform_indices = @transform_3, window_bounds = array<i64: 128, 128>}, {pipeline_mode = #tpu.pipeline_mode<synchronous>, transform_indices = @transform_4, window_bounds = array<i64: 1, 128>}, {pipeline_mode = #tpu.pipeline_mode<synchronous>, transform_indices = @transform_5, window_bounds = array<i64: 128, 128>}, {pipeline_mode = #tpu.pipeline_mode<synchronous>, transform_indices = @transform_6, window_bounds = array<i64: 1, 128>}, {pipeline_mode = #tpu.pipeline_mode<synchronous>, transform_indices = @transform_7, window_bounds = array<i64: 1, 128>}, {pipeline_mode = #tpu.pipeline_mode<synchronous>, transform_indices = @transform_8, window_bounds = array<i64: 1, 128>}, {transform_indices = @transform_9, window_bounds = array<i64: 8, 128>}]} {
    %c0 = arith.constant 0 : index
    %c0_0 = arith.constant 0 : index
    %0 = vector.load %arg1[%c0, %c0_0] : memref<8x128xbf16, #tpu.memory_space<vmem>>, vector<8x128xbf16>
    %c0_1 = arith.constant 0 : index
    %c0_2 = arith.constant 0 : index
    %1 = vector.load %arg2[%c0_1, %c0_2] : memref<128x128xbf16, #tpu.memory_space<vmem>>, vector<128x128xbf16>
    %cst = arith.constant dense<0.000000e+00> : vector<8x128xf32>
    %2 = tpu.matmul %0, %1, %cst {dimension_numbers = #tpu.dot_dimension_numbers<[1], [0], [0], [1], [0, 0, 1, 1], [], []>} : vector<8x128xbf16>, vector<128x128xbf16>, vector<8x128xf32> -> vector<8x128xf32>
    %c0_3 = arith.constant 0 : index
    %c0_4 = arith.constant 0 : index
    %3 = vector.load %arg3[%c0_3, %c0_4] : memref<1x128xf32, #tpu.memory_space<vmem>>, vector<1x128xf32>
    %4 = vector.broadcast %3 : vector<1x128xf32> to vector<8x128xf32>
    %5 = arith.addf %2, %4 : vector<8x128xf32>
    %cst_5 = arith.constant 0.000000e+00 : f32
    %6 = vector.broadcast %cst_5 : f32 to vector<8x128xf32>
    %7 = arith.maximumf %5, %6 : vector<8x128xf32>
    %8 = arith.truncf %7 : vector<8x128xf32> to vector<8x128xbf16>
    %c0_6 = arith.constant 0 : index
    %c0_7 = arith.constant 0 : index
    %9 = vector.load %arg4[%c0_6, %c0_7] : memref<128x128xbf16, #tpu.memory_space<vmem>>, vector<128x128xbf16>
    %cst_8 = arith.constant dense<0.000000e+00> : vector<8x128xf32>
    %10 = tpu.matmul %8, %9, %cst_8 {dimension_numbers = #tpu.dot_dimension_numbers<[1], [0], [0], [1], [0, 0, 1, 1], [], []>} : vector<8x128xbf16>, vector<128x128xbf16>, vector<8x128xf32> -> vector<8x128xf32>
    %c0_9 = arith.constant 0 : index
    %c0_10 = arith.constant 0 : index
    %11 = vector.load %arg5[%c0_9, %c0_10] : memref<1x128xf32, #tpu.memory_space<vmem>>, vector<1x128xf32>
    %12 = vector.broadcast %11 : vector<1x128xf32> to vector<8x128xf32>
    %13 = arith.addf %10, %12 : vector<8x128xf32>
    %cst_11 = arith.constant 0.000000e+00 : f32
    %14 = vector.broadcast %cst_11 : f32 to vector<8x128xf32>
    %15 = arith.maximumf %13, %14 : vector<8x128xf32>
    %16 = arith.truncf %15 : vector<8x128xf32> to vector<8x128xbf16>
    %c0_12 = arith.constant 0 : index
    %c0_13 = arith.constant 0 : index
    %17 = vector.load %arg6[%c0_12, %c0_13] : memref<128x128xbf16, #tpu.memory_space<vmem>>, vector<128x128xbf16>
    %cst_14 = arith.constant dense<0.000000e+00> : vector<8x128xf32>
    %18 = tpu.matmul %16, %17, %cst_14 {dimension_numbers = #tpu.dot_dimension_numbers<[1], [0], [0], [1], [0, 0, 1, 1], [], []>} : vector<8x128xbf16>, vector<128x128xbf16>, vector<8x128xf32> -> vector<8x128xf32>
    %c0_15 = arith.constant 0 : index
    %c0_16 = arith.constant 0 : index
    %19 = vector.load %arg7[%c0_15, %c0_16] : memref<1x128xf32, #tpu.memory_space<vmem>>, vector<1x128xf32>
    %20 = vector.broadcast %19 : vector<1x128xf32> to vector<8x128xf32>
    %21 = arith.addf %18, %20 : vector<8x128xf32>
    %c0_17 = arith.constant 0 : index
    %c0_18 = arith.constant 0 : index
    %22 = vector.load %arg8[%c0_17, %c0_18] : memref<1x128xf32, #tpu.memory_space<vmem>>, vector<1x128xf32>
    %23 = vector.broadcast %22 : vector<1x128xf32> to vector<8x128xf32>
    %24 = arith.maximumf %21, %23 : vector<8x128xf32>
    %c0_19 = arith.constant 0 : index
    %c0_20 = arith.constant 0 : index
    %25 = vector.load %arg9[%c0_19, %c0_20] : memref<1x128xf32, #tpu.memory_space<vmem>>, vector<1x128xf32>
    %26 = vector.broadcast %25 : vector<1x128xf32> to vector<8x128xf32>
    %27 = arith.minimumf %24, %26 : vector<8x128xf32>
    %c0_21 = arith.constant 0 : index
    %c0_22 = arith.constant 0 : index
    %28 = vector.load %arg10[%c0_21, %c0_22] : memref<8x128xf32, #tpu.memory_space<vmem>>, vector<8x128xf32>
    tpu.vector_store %arg10[%c0_21, %c0_22], %27 {strides = array<i32>} : memref<8x128xf32, #tpu.memory_space<vmem>>, vector<8x128xf32>,
    return
  }
  func.func @transform_0(%arg0: i32) -> (i32, i32) {
    %c0_i32 = arith.constant 0 : i32
    %c0_i32_0 = arith.constant 0 : i32
    return %arg0, %c0_i32 : i32, i32
  }
  func.func @transform_1(%arg0: i32) -> (i32, i32) {
    %c0_i32 = arith.constant 0 : i32
    %c0_i32_0 = arith.constant 0 : i32
    %c0_i32_1 = arith.constant 0 : i32
    return %c0_i32, %c0_i32_0 : i32, i32
  }
  func.func @transform_2(%arg0: i32) -> (i32, i32) {
    %c0_i32 = arith.constant 0 : i32
    %c0_i32_0 = arith.constant 0 : i32
    %c0_i32_1 = arith.constant 0 : i32
    return %c0_i32, %c0_i32_0 : i32, i32
  }
  func.func @transform_3(%arg0: i32) -> (i32, i32) {
    %c0_i32 = arith.constant 0 : i32
    %c0_i32_0 = arith.constant 0 : i32
    %c0_i32_1 = arith.constant 0 : i32
    return %c0_i32, %c0_i32_0 : i32, i32
  }
  func.func @transform_4(%arg0: i32) -> (i32, i32) {
    %c0_i32 = arith.constant 0 : i32
    %c0_i32_0 = arith.constant 0 : i32
    %c0_i32_1 = arith.constant 0 : i32
    return %c0_i32, %c0_i32_0 : i32, i32
  }
  func.func @transform_5(%arg0: i32) -> (i32, i32) {
    %c0_i32 = arith.constant 0 : i32
    %c0_i32_0 = arith.constant 0 : i32
    %c0_i32_1 = arith.constant 0 : i32
    return %c0_i32, %c0_i32_0 : i32, i32
  }
  func.func @transform_6(%arg0: i32) -> (i32, i32) {
    %c0_i32 = arith.constant 0 : i32
    %c0_i32_0 = arith.constant 0 : i32
    %c0_i32_1 = arith.constant 0 : i32
    return %c0_i32, %c0_i32_0 : i32, i32
  }
  func.func @transform_7(%arg0: i32) -> (i32, i32) {
    %c0_i32 = arith.constant 0 : i32
    %c0_i32_0 = arith.constant 0 : i32
    %c0_i32_1 = arith.constant 0 : i32
    return %c0_i32, %c0_i32_0 : i32, i32
  }
  func.func @transform_8(%arg0: i32) -> (i32, i32) {
    %c0_i32 = arith.constant 0 : i32
    %c0_i32_0 = arith.constant 0 : i32
    %c0_i32_1 = arith.constant 0 : i32
    return %c0_i32, %c0_i32_0 : i32, i32
  }
  func.func @transform_9(%arg0: i32) -> (i32, i32) {
    %c0_i32 = arith.constant 0 : i32
    %c0_i32_0 = arith.constant 0 : i32
    return %arg0, %c0_i32 : i32, i32
  }
}

</mosaic_0001>

<llo_original>
// kernel: tpu_custom_call.1
$region0: #{tpu_custom_call.1}
  #allocation0 [shape = 'u32[]', space=smem, size = 0x4, offset = 0x4, fixed_abs, tag = 'smem constant byte address 0x4 - core index']
  #allocation1 [shape = 'u32[144,128]{1,0:T(1,128)}', space=vmem, size = 0x12000, scoped, tag = 'internal scratch']
  %s0 = inlined_call_operand.hbm [shape: bf16[8,128], index: 0, kind: input, shape index: {}]
  %s1 = inlined_call_operand.hbm [shape: bf16[128,128], index: 1, kind: input, shape index: {}]
  %s2 = inlined_call_operand.vmem [shape: f32[1,128], index: 2, kind: input, shape index: {}]
  %s3 = inlined_call_operand.hbm [shape: bf16[128,128], index: 3, kind: input, shape index: {}]
  %s4 = inlined_call_operand.vmem [shape: f32[1,128], index: 4, kind: input, shape index: {}]
  %s5 = inlined_call_operand.hbm [shape: bf16[128,128], index: 5, kind: input, shape index: {}]
  %s6 = inlined_call_operand.vmem [shape: f32[1,128], index: 6, kind: input, shape index: {}]
  %s7 = inlined_call_operand.vmem [shape: f32[1,128], index: 7, kind: input, shape index: {}]
  %s8 = inlined_call_operand.vmem [shape: f32[1,128], index: 8, kind: input, shape index: {}]
  %s9 = inlined_call_operand.hbm [shape: f32[8,128], index: 9, kind: output, shape index: {}]
  %s10 = sld [smem:[#allocation0]]
  $region62: #{tpu_custom_call.1} parent=0
    _
  %s12 = ssub.s32 1, %s10
  %s13 = scalar_select 0, %s12, %s10
  $region1: #{tpu_custom_call.1} parent=0
    #allocation2 [shape = 'u8[2048]{0}', space=vmem, size = 0x800, scoped, tag = 'input window, operand 0, single buffered']
    #allocation3 [shape = 's32[1]{0}', space=sflag, size = 0x4, scoped, tag = 'scoped memory for tpu_custom_call.1']
    #allocation4 [shape = 's32[1]{0}', space=sflag, size = 0x4, scoped, tag = 'scoped memory for tpu_custom_call.1']
    #allocation5 [shape = 'u8[32768]{0}', space=vmem, size = 0x8000, scoped, tag = 'input window, operand 1, single buffered']
    #allocation6 [shape = 's32[1]{0}', space=sflag, size = 0x4, scoped, tag = 'scoped memory for tpu_custom_call.1']
    #allocation7 [shape = 'u8[32768]{0}', space=vmem, size = 0x8000, scoped, tag = 'input window, operand 3, single buffered']
    #allocation8 [shape = 'u8[32768]{0}', space=vmem, size = 0x8000, scoped, tag = 'input window, operand 5, single buffered']
    #allocation9 [shape = 's32[1]{0}', space=sflag, size = 0x4, scoped, tag = 'scoped memory for tpu_custom_call.1']
    #allocation10 [shape = 'u8[4096]{0}', space=vmem, size = 0x1000, scoped, tag = 'output window, operand 0, single buffered']
    %14 = vsyncpa [#allocation3], 0
    %15 = vsyncpa [#allocation6], 0
    %16 = vsyncpa [#allocation9], 0
    %17 = vsyncpa [#allocation4], 0
    // Predicated region
    $region2: #{tpu_custom_call.1} parent=1 // pred_check
      _
    $region3: #{tpu_custom_call.1} parent=1 // pred_check_branch
      %19 = sbr.rel (0) target = $region5
    $region4: #{tpu_custom_call.1} parent=1 // pred_region
      %s21 = ssub.s32 64, 64
      %22 = vsyncadd [#allocation3], %s21
      %s24 = sshll.u32 [#allocation2], 4
      %s25 = int_to_ptr.vmem [resolvable:$true] %s24
      %27 = dma.hbm_to_vmem [thread:$0]  %s0, 64, %s25, [#allocation3]
    $region5: #{tpu_custom_call.1} parent=1 // pred_fallthru
      _
    // Predicated region
    $region6: #{tpu_custom_call.1} parent=1 // pred_check
      _
    $region7: #{tpu_custom_call.1} parent=1 // pred_check_branch
      %29 = sbr.rel (0) target = $region9
    $region8: #{tpu_custom_call.1} parent=1 // pred_region
      %s31 = ssub.s32 1024, 1024
      %32 = vsyncadd [#allocation6], %s31
      %s33 = sshll.u32 [#allocation5], 4
      %s34 = int_to_ptr.vmem [resolvable:$true] %s33
      %39 = dma.hbm_to_vmem [thread:$0]  %s1, 1024, %s34, [#allocation6], 64, 64, 4
    $region9: #{tpu_custom_call.1} parent=1 // pred_fallthru
      _
    // Predicated region
    $region10: #{tpu_custom_call.1} parent=1 // pred_check
      _
    $region11: #{tpu_custom_call.1} parent=1 // pred_check_branch
      %41 = sbr.rel (0) target = $region13
    $region12: #{tpu_custom_call.1} parent=1 // pred_region
      _
    $region13: #{tpu_custom_call.1} parent=1 // pred_fallthru
      _
    // Predicated region
    $region14: #{tpu_custom_call.1} parent=1 // pred_check
      _
    $region15: #{tpu_custom_call.1} parent=1 // pred_check_branch
      %43 = sbr.rel (0) target = $region17
    $region16: #{tpu_custom_call.1} parent=1 // pred_region
      %s45 = ssub.s32 1024, 1024
      %46 = vsyncadd [#allocation6], %s45
      %s47 = sshll.u32 [#allocation7], 4
      %s48 = int_to_ptr.vmem [resolvable:$true] %s47
      %53 = dma.hbm_to_vmem [thread:$0]  %s3, 1024, %s48, [#allocation6], 64, 64, 4
    $region17: #{tpu_custom_call.1} parent=1 // pred_fallthru
      _
    // Predicated region
    $region18: #{tpu_custom_call.1} parent=1 // pred_check
      _
    $region19: #{tpu_custom_call.1} parent=1 // pred_check_branch
      %55 = sbr.rel (0) target = $region21
    $region20: #{tpu_custom_call.1} parent=1 // pred_region
      _
    $region21: #{tpu_custom_call.1} parent=1 // pred_fallthru
      _
    // Predicated region
    $region22: #{tpu_custom_call.1} parent=1 // pred_check
      _
    $region23: #{tpu_custom_call.1} parent=1 // pred_check_branch
      %57 = sbr.rel (0) target = $region25
    $region24: #{tpu_custom_call.1} parent=1 // pred_region
      %s59 = ssub.s32 1024, 1024
      %60 = vsyncadd [#allocation9], %s59
      %s61 = sshll.u32 [#allocation8], 4
      %s62 = int_to_ptr.vmem [resolvable:$true] %s61
      %67 = dma.hbm_to_vmem [thread:$0]  %s5, 1024, %s62, [#allocation9], 64, 64, 4
    $region25: #{tpu_custom_call.1} parent=1 // pred_fallthru
      _
    // Predicated region
    $region26: #{tpu_custom_call.1} parent=1 // pred_check
      _
    $region27: #{tpu_custom_call.1} parent=1 // pred_check_branch
      %69 = sbr.rel (0) target = $region29
    $region28: #{tpu_custom_call.1} parent=1 // pred_region
      _
    $region29: #{tpu_custom_call.1} parent=1 // pred_fallthru
      _
    // Predicated region
    $region30: #{tpu_custom_call.1} parent=1 // pred_check
      _
    $region31: #{tpu_custom_call.1} parent=1 // pred_check_branch
      %71 = sbr.rel (0) target = $region33
    $region32: #{tpu_custom_call.1} parent=1 // pred_region
      _
    $region33: #{tpu_custom_call.1} parent=1 // pred_fallthru
      _
    // Predicated region
    $region34: #{tpu_custom_call.1} parent=1 // pred_check
      _
    $region35: #{tpu_custom_call.1} parent=1 // pred_check_branch
      %73 = sbr.rel (0) target = $region37
    $region36: #{tpu_custom_call.1} parent=1 // pred_region
      _
    $region37: #{tpu_custom_call.1} parent=1 // pred_fallthru
      _
    // Predicated region
    $region38: #{tpu_custom_call.1} parent=1 // pred_check
      _
    $region39: #{tpu_custom_call.1} parent=1 // pred_check_branch
      %75 = sbr.rel (0) target = $region41
    $region40: #{tpu_custom_call.1} parent=1 // pred_region
      %76 = dma.done [#allocation3], 64
    $region41: #{tpu_custom_call.1} parent=1 // pred_fallthru
      _
    // Predicated region
    $region42: #{tpu_custom_call.1} parent=1 // pred_check
      _
    $region43: #{tpu_custom_call.1} parent=1 // pred_check_branch
      %78 = sbr.rel (0) target = $region45
    $region44: #{tpu_custom_call.1} parent=1 // pred_region
      %79 = dma.done [#allocation6], 1024
    $region45: #{tpu_custom_call.1} parent=1 // pred_fallthru
      _
    // Predicated region
    $region46: #{tpu_custom_call.1} parent=1 // pred_check
      _
    $region47: #{tpu_custom_call.1} parent=1 // pred_check_branch
      %81 = sbr.rel (0) target = $region49
    $region48: #{tpu_custom_call.1} parent=1 // pred_region
      %82 = dma.done [#allocation6], 1024
    $region49: #{tpu_custom_call.1} parent=1 // pred_fallthru
      _
    // Predicated region
    $region50: #{tpu_custom_call.1} parent=1 // pred_check
      _
    $region51: #{tpu_custom_call.1} parent=1 // pred_check_branch
      %84 = sbr.rel (0) target = $region53
    $region52: #{tpu_custom_call.1} parent=1 // pred_region
      %85 = dma.done [#allocation9], 1024
    $region53: #{tpu_custom_call.1} parent=1 // pred_fallthru
      _
    %v87 = vld [vmem:[#allocation2] sm:$0xf]
    %v88 = vld [vmem:[#allocation5] sm:$0xf]
    %v89 = vld [vmem:[#allocation5 + $0x4] sm:$0xf]
    %v90 = vld [vmem:[#allocation5 + $0x8] sm:$0xf]
    %v91 = vld [vmem:[#allocation5 + $0xc] sm:$0xf]
    %v92 = vld [vmem:[#allocation5 + $0x10] sm:$0xf]
    %v93 = vld [vmem:[#allocation5 + $0x14] sm:$0xf]
    %v94 = vld [vmem:[#allocation5 + $0x18] sm:$0xf]
    %v95 = vld [vmem:[#allocation5 + $0x1c] sm:$0xf]
    %v96 = vld [vmem:[#allocation5 + $0x20] sm:$0xf]
    %v97 = vld [vmem:[#allocation5 + $0x24] sm:$0xf]
    %v98 = vld [vmem:[#allocation5 + $0x28] sm:$0xf]
    %v99 = vld [vmem:[#allocation5 + $0x2c] sm:$0xf]
    %v100 = vld [vmem:[#allocation5 + $0x30] sm:$0xf]
    %v101 = vld [vmem:[#allocation5 + $0x34] sm:$0xf]
    %v102 = vld [vmem:[#allocation5 + $0x38] sm:$0xf]
    %v103 = vld [vmem:[#allocation5 + $0x3c] sm:$0xf]
    %v104 = vld [vmem:[%s2] sm:$0x1]
    %v106 = vlaneseq
    %v107 = vshrl.u32 %v106, 7
    %v108 = vsub.s32 0, %v107
    %v109 = vrot.slane %v104, %v108
    %v127 = vunpack.c.l.b16 %v88
    %v128 = vunpack.c.l.b16 %v89
    %v129 = vunpack.c.l.b16 %v90
    %v130 = vunpack.c.l.b16 %v91
    %v131 = vunpack.c.l.b16 %v92
    %v132 = vunpack.c.l.b16 %v93
    %v133 = vunpack.c.l.b16 %v94
    %v134 = vunpack.c.l.b16 %v95
    %v135 = vunpack.c.l.b16 %v96
    %v136 = vunpack.c.l.b16 %v97
    %v137 = vunpack.c.l.b16 %v98
    %v138 = vunpack.c.l.b16 %v99
    %v139 = vunpack.c.l.b16 %v100
    %v140 = vunpack.c.l.b16 %v101
    %v141 = vunpack.c.l.b16 %v102
    %v142 = vunpack.c.l.b16 %v103
    %v143 = vpack.c.b16 %v128, %v127
    %v144 = vpack.c.b16 %v130, %v129
    %v145 = vpack.c.b16 %v132, %v131
    %v146 = vpack.c.b16 %v134, %v133
    %v147 = vpack.c.b16 %v136, %v135
    %v148 = vpack.c.b16 %v138, %v137
    %v149 = vpack.c.b16 %v140, %v139
    %v150 = vpack.c.b16 %v142, %v141
    %159 = vmatprep.subr.bf16.mxu0 0
    %160 = vmatpush1.bf16.msra.mxu0 %v143
    %161 = vmatprep.subr.bf16.mxu0 0
    %162 = vmatpush1.bf16.msra.mxu0 %v144
    %163 = vmatprep.subr.bf16.mxu0 0
    %164 = vmatpush1.bf16.msra.mxu0 %v145
    %165 = vmatprep.subr.bf16.mxu0 0
    %166 = vmatpush1.bf16.msra.mxu0 %v146
    %167 = vmatprep.subr.bf16.mxu0 0
    %168 = vmatpush1.bf16.msra.mxu0 %v147
    %169 = vmatprep.subr.bf16.mxu0 0
    %170 = vmatpush1.bf16.msra.mxu0 %v148
    %171 = vmatprep.subr.bf16.mxu0 0
    %172 = vmatpush1.bf16.msra.mxu0 %v149
    %173 = vmatprep.subr.bf16.mxu0 0
    %174 = vmatpush1.bf16.msra.mxu0 %v150
    %175 = vmatprep.subr.bf16.mxu0 0
    %176 = vmatpush1.bf16.msra.mxu0 0
    %177 = vmatprep.subr.bf16.mxu0 0
    %178 = vmatpush1.bf16.msra.mxu0 0
    %179 = vmatprep.subr.bf16.mxu0 0
    %180 = vmatpush1.bf16.msra.mxu0 0
    %181 = vmatprep.subr.bf16.mxu0 0
    %182 = vmatpush1.bf16.msra.mxu0 0
    %183 = vmatprep.subr.bf16.mxu0 0
    %184 = vmatpush1.bf16.msra.mxu0 0
    %185 = vmatprep.subr.bf16.mxu0 0
    %186 = vmatpush1.bf16.msra.mxu0 0
    %187 = vmatprep.subr.bf16.mxu0 0
    %188 = vmatpush1.bf16.msra.mxu0 0
    %189 = vmatprep.subr.bf16.mxu0 0
    %190 = vmatpush1.bf16.msra.mxu0 0
    %191 = vmatprep.mubr.bf16.mxu0 0
    %192 = vmatmul.mubr.bf16.gmra.mrb[0].mxu0 %v87
    %v193 = vpop.f32.mrb[0].mxu0
    %v194 = vadd.f32 %v109, %v193
    %v195 = vpop.f32.mrb[0].mxu0
    %v196 = vpop.f32.mrb[0].mxu0
    %v197 = vpop.f32.mrb[0].mxu0
    %198 = vdwg.mxu0
    %v199 = vmax.f32 %v194, 0.0
    %v200 = vpack.c.bf16 %v199, %v199
    %v201 = vld [vmem:[#allocation7] sm:$0xf]
    %v202 = vld [vmem:[#allocation7 + $0x4] sm:$0xf]
    %v203 = vld [vmem:[#allocation7 + $0x8] sm:$0xf]
    %v204 = vld [vmem:[#allocation7 + $0xc] sm:$0xf]
    %v205 = vld [vmem:[#allocation7 + $0x10] sm:$0xf]
    %v206 = vld [vmem:[#allocation7 + $0x14] sm:$0xf]
    %v207 = vld [vmem:[#allocation7 + $0x18] sm:$0xf]
    %v208 = vld [vmem:[#allocation7 + $0x1c] sm:$0xf]
    %v209 = vld [vmem:[#allocation7 + $0x20] sm:$0xf]
    %v210 = vld [vmem:[#allocation7 + $0x24] sm:$0xf]
    %v211 = vld [vmem:[#allocation7 + $0x28] sm:$0xf]
    %v212 = vld [vmem:[#allocation7 + $0x2c] sm:$0xf]
    %v213 = vld [vmem:[#allocation7 + $0x30] sm:$0xf]
    %v214 = vld [vmem:[#allocation7 + $0x34] sm:$0xf]
    %v215 = vld [vmem:[#allocation7 + $0x38] sm:$0xf]
    %v216 = vld [vmem:[#allocation7 + $0x3c] sm:$0xf]
    %v217 = vld [vmem:[%s4] sm:$0x1]
    %v219 = vlaneseq
    %v220 = vshrl.u32 %v219, 7
    %v221 = vsub.s32 0, %v220
    %v222 = vrot.slane %v217, %v221
    %v240 = vunpack.c.l.b16 %v201
    %v241 = vunpack.c.l.b16 %v202
    %v242 = vunpack.c.l.b16 %v203
    %v243 = vunpack.c.l.b16 %v204
    %v244 = vunpack.c.l.b16 %v205
    %v245 = vunpack.c.l.b16 %v206
    %v246 = vunpack.c.l.b16 %v207
    %v247 = vunpack.c.l.b16 %v208
    %v248 = vunpack.c.l.b16 %v209
    %v249 = vunpack.c.l.b16 %v210
    %v250 = vunpack.c.l.b16 %v211
    %v251 = vunpack.c.l.b16 %v212
    %v252 = vunpack.c.l.b16 %v213
    %v253 = vunpack.c.l.b16 %v214
    %v254 = vunpack.c.l.b16 %v215
    %v255 = vunpack.c.l.b16 %v216
    %v256 = vpack.c.b16 %v241, %v240
    %v257 = vpack.c.b16 %v243, %v242
    %v258 = vpack.c.b16 %v245, %v244
    %v259 = vpack.c.b16 %v247, %v246
    %v260 = vpack.c.b16 %v249, %v248
    %v261 = vpack.c.b16 %v251, %v250
    %v262 = vpack.c.b16 %v253, %v252
    %v263 = vpack.c.b16 %v255, %v254
    %272 = vmatprep.subr.bf16.mxu0 0
    %273 = vmatpush1.bf16.msra.mxu0 %v256
    %274 = vmatprep.subr.bf16.mxu0 0
    %275 = vmatpush1.bf16.msra.mxu0 %v257
    %276 = vmatprep.subr.bf16.mxu0 0
    %277 = vmatpush1.bf16.msra.mxu0 %v258
    %278 = vmatprep.subr.bf16.mxu0 0
    %279 = vmatpush1.bf16.msra.mxu0 %v259
    %280 = vmatprep.subr.bf16.mxu0 0
    %281 = vmatpush1.bf16.msra.mxu0 %v260
    %282 = vmatprep.subr.bf16.mxu0 0
    %283 = vmatpush1.bf16.msra.mxu0 %v261
    %284 = vmatprep.subr.bf16.mxu0 0
    %285 = vmatpush1.bf16.msra.mxu0 %v262
    %286 = vmatprep.subr.bf16.mxu0 0
    %287 = vmatpush1.bf16.msra.mxu0 %v263
    %288 = vmatprep.subr.bf16.mxu0 0
    %289 = vmatpush1.bf16.msra.mxu0 0
    %290 = vmatprep.subr.bf16.mxu0 0
    %291 = vmatpush1.bf16.msra.mxu0 0
    %292 = vmatprep.subr.bf16.mxu0 0
    %293 = vmatpush1.bf16.msra.mxu0 0
    %294 = vmatprep.subr.bf16.mxu0 0
    %295 = vmatpush1.bf16.msra.mxu0 0
    %296 = vmatprep.subr.bf16.mxu0 0
    %297 = vmatpush1.bf16.msra.mxu0 0
    %298 = vmatprep.subr.bf16.mxu0 0
    %299 = vmatpush1.bf16.msra.mxu0 0
    %300 = vmatprep.subr.bf16.mxu0 0
    %301 = vmatpush1.bf16.msra.mxu0 0
    %302 = vmatprep.subr.bf16.mxu0 0
    %303 = vmatpush1.bf16.msra.mxu0 0
    %304 = vmatprep.mubr.bf16.mxu0 0
    %305 = vmatmul.mubr.bf16.gmra.mrb[0].mxu0 %v200
    %v306 = vpop.f32.mrb[0].mxu0
    %v307 = vadd.f32 %v222, %v306
    %v308 = vpop.f32.mrb[0].mxu0
    %v309 = vpop.f32.mrb[0].mxu0
    %v310 = vpop.f32.mrb[0].mxu0
    %311 = vdwg.mxu0
    %v312 = vmax.f32 %v307, 0.0
    %v313 = vpack.c.bf16 %v312, %v312
    %v314 = vld [vmem:[#allocation8] sm:$0xf]
    %v315 = vld [vmem:[#allocation8 + $0x4] sm:$0xf]
    %v316 = vld [vmem:[#allocation8 + $0x8] sm:$0xf]
    %v317 = vld [vmem:[#allocation8 + $0xc] sm:$0xf]
    %v318 = vld [vmem:[#allocation8 + $0x10] sm:$0xf]
    %v319 = vld [vmem:[#allocation8 + $0x14] sm:$0xf]
    %v320 = vld [vmem:[#allocation8 + $0x18] sm:$0xf]
    %v321 = vld [vmem:[#allocation8 + $0x1c] sm:$0xf]
    %v322 = vld [vmem:[#allocation8 + $0x20] sm:$0xf]
    %v323 = vld [vmem:[#allocation8 + $0x24] sm:$0xf]
    %v324 = vld [vmem:[#allocation8 + $0x28] sm:$0xf]
    %v325 = vld [vmem:[#allocation8 + $0x2c] sm:$0xf]
    %v326 = vld [vmem:[#allocation8 + $0x30] sm:$0xf]
    %v327 = vld [vmem:[#allocation8 + $0x34] sm:$0xf]
    %v328 = vld [vmem:[#allocation8 + $0x38] sm:$0xf]
    %v329 = vld [vmem:[#allocation8 + $0x3c] sm:$0xf]
    %v330 = vld [vmem:[%s6] sm:$0x1]
    %v332 = vlaneseq
    %v333 = vshrl.u32 %v332, 7
    %v334 = vsub.s32 0, %v333
    %v335 = vrot.slane %v330, %v334
    %v353 = vunpack.c.l.b16 %v314
    %v354 = vunpack.c.l.b16 %v315
    %v355 = vunpack.c.l.b16 %v316
    %v356 = vunpack.c.l.b16 %v317
    %v357 = vunpack.c.l.b16 %v318
    %v358 = vunpack.c.l.b16 %v319
    %v359 = vunpack.c.l.b16 %v320
    %v360 = vunpack.c.l.b16 %v321
    %v361 = vunpack.c.l.b16 %v322
    %v362 = vunpack.c.l.b16 %v323
    %v363 = vunpack.c.l.b16 %v324
    %v364 = vunpack.c.l.b16 %v325
    %v365 = vunpack.c.l.b16 %v326
    %v366 = vunpack.c.l.b16 %v327
    %v367 = vunpack.c.l.b16 %v328
    %v368 = vunpack.c.l.b16 %v329
    %v369 = vpack.c.b16 %v354, %v353
    %v370 = vpack.c.b16 %v356, %v355
    %v371 = vpack.c.b16 %v358, %v357
    %v372 = vpack.c.b16 %v360, %v359
    %v373 = vpack.c.b16 %v362, %v361
    %v374 = vpack.c.b16 %v364, %v363
    %v375 = vpack.c.b16 %v366, %v365
    %v376 = vpack.c.b16 %v368, %v367
    %385 = vmatprep.subr.bf16.mxu0 0
    %386 = vmatpush1.bf16.msra.mxu0 %v369
    %387 = vmatprep.subr.bf16.mxu0 0
    %388 = vmatpush1.bf16.msra.mxu0 %v370
    %389 = vmatprep.subr.bf16.mxu0 0
    %390 = vmatpush1.bf16.msra.mxu0 %v371
    %391 = vmatprep.subr.bf16.mxu0 0
    %392 = vmatpush1.bf16.msra.mxu0 %v372
    %393 = vmatprep.subr.bf16.mxu0 0
    %394 = vmatpush1.bf16.msra.mxu0 %v373
    %395 = vmatprep.subr.bf16.mxu0 0
    %396 = vmatpush1.bf16.msra.mxu0 %v374
    %397 = vmatprep.subr.bf16.mxu0 0
    %398 = vmatpush1.bf16.msra.mxu0 %v375
    %399 = vmatprep.subr.bf16.mxu0 0
    %400 = vmatpush1.bf16.msra.mxu0 %v376
    %401 = vmatprep.subr.bf16.mxu0 0
    %402 = vmatpush1.bf16.msra.mxu0 0
    %403 = vmatprep.subr.bf16.mxu0 0
    %404 = vmatpush1.bf16.msra.mxu0 0
    %405 = vmatprep.subr.bf16.mxu0 0
    %406 = vmatpush1.bf16.msra.mxu0 0
    %407 = vmatprep.subr.bf16.mxu0 0
    %408 = vmatpush1.bf16.msra.mxu0 0
    %409 = vmatprep.subr.bf16.mxu0 0
    %410 = vmatpush1.bf16.msra.mxu0 0
    %411 = vmatprep.subr.bf16.mxu0 0
    %412 = vmatpush1.bf16.msra.mxu0 0
    %413 = vmatprep.subr.bf16.mxu0 0
    %414 = vmatpush1.bf16.msra.mxu0 0
    %415 = vmatprep.subr.bf16.mxu0 0
    %416 = vmatpush1.bf16.msra.mxu0 0
    %417 = vmatprep.mubr.bf16.mxu0 0
    %418 = vmatmul.mubr.bf16.gmra.mrb[0].mxu0 %v313
    %v419 = vpop.f32.mrb[0].mxu0
    %v420 = vadd.f32 %v335, %v419
    %v421 = vpop.f32.mrb[0].mxu0
    %v422 = vpop.f32.mrb[0].mxu0
    %v423 = vpop.f32.mrb[0].mxu0
    %424 = vdwg.mxu0
    %v425 = vld [vmem:[%s7] sm:$0x1]
    %v427 = vlaneseq
    %v428 = vshrl.u32 %v427, 7
    %v429 = vsub.s32 0, %v428
    %v430 = vrot.slane %v425, %v429
    %v432 = vmax.f32 %v420, %v430
    %v433 = vld [vmem:[%s8] sm:$0x1]
    %v435 = vlaneseq
    %v436 = vshrl.u32 %v435, 7
    %v437 = vsub.s32 0, %v436
    %v438 = vrot.slane %v433, %v437
    %v440 = vmin.f32 %v432, %v438
    %441 = vst [vmem:[#allocation10] sm:$0xff] %v440
    // Predicated region
    $region54: #{tpu_custom_call.1} parent=1 // pred_check
      _
    $region55: #{tpu_custom_call.1} parent=1 // pred_check_branch
      %443 = sbr.rel (0) target = $region57
    $region56: #{tpu_custom_call.1} parent=1 // pred_region
      %s445 = ssub.s32 128, 128
      %446 = vsyncadd [#allocation4], %s445
      %s448 = sshll.u32 [#allocation10], 4
      %s449 = int_to_ptr.vmem [resolvable:$true] %s448
      %451 = dma.vmem_to_hbm [thread:$0]  %s449, 128, %s9, [#allocation4]
    $region57: #{tpu_custom_call.1} parent=1 // pred_fallthru
      _
    // Predicated region
    $region58: #{tpu_custom_call.1} parent=1 // pred_check
      _
    $region59: #{tpu_custom_call.1} parent=1 // pred_check_branch
      %453 = sbr.rel (0) target = $region61
    $region60: #{tpu_custom_call.1} parent=1 // pred_region
      %454 = dma.done [#allocation4], 128
    $region61: #{tpu_custom_call.1} parent=1 // pred_fallthru
      _
    %455 = vsyncpa [#allocation3], 1
    %456 = vsyncpa [#allocation6], 1
    %457 = vsyncpa [#allocation9], 1
    %458 = vsyncpa [#allocation4], 1

</llo_original>
